<compile_context>
chip_gen: v5e
topology: v5e:2x2
jax: 0.10.0
libtpu: 0.0.40
codegen_flags: <defaults>
</compile_context>

<pallas_src>
import functools

import jax
import jax.numpy as jnp
from jax.experimental import pallas as pl
from jax.experimental.pallas import tpu as pltpu

ALPHA = 0.01
GAMMA = 2                         # expressed as explicit multiplies in the kernel
LANES = 128                       # vreg lane width (last dim of every block)
MIN_KERNEL_ELEMS = 8 * LANES      # below this, plain jnp in the wrapper is cheaper


def _round_up(x, m):
    return ((x + m - 1) // m) * m


@functools.lru_cache(maxsize=None)
def _device_cfg():
    """Per-generation tiling config: (max_block_rows, vmem_limit_bytes|None, chunks)."""
    try:
        kind = jax.devices()[0].device_kind.lower()
    except Exception:
        kind = ""
    if "v7" in kind:                      # 2 TensorCores/chip, 64 MiB VMEM/TC
        # TODO(synk): verify "parallel" shards the chunk axis across both TCs on
        # v7x; switch to pltpu.CORE_PARALLEL on that axis if it does not.
        return 8192, 32 * 1024 * 1024, 2
    if "v6" in kind:                      # v6e: 1 TC, 128 MiB VMEM
        return 8192, 32 * 1024 * 1024, 1
    if "v5e" in kind or "lite" in kind:   # v5e: 16 MiB default scoped VMEM
        return 4096, 24 * 1024 * 1024, 1
    if "v5" in kind or "v4" in kind:      # v5p / v4: megacore (2 TCs)
        return 8192, 32 * 1024 * 1024, 2
    return 2048, None, 1                  # unknown / older chips: conservative


def _row_partial(contrib, block_rows):
    """(block_rows,128) f32 -> (8,128) partial sums using vreg-to-vreg VPU adds.

    block_rows is always a multiple of 8 (wrapper guarantees it), so the reshape
    only regroups whole (8,128) vreg tiles (no relayout).  Two-level tree keeps
    the serial add chain short for large blocks.
    """
    k = block_rows // 8
    c = contrib.reshape(k, 8, LANES)
    if k % 8 == 0 and k > 8:
        c = c.reshape(k // 8, 8, 8, LANES).sum(axis=1)
    return c.sum(axis=0)


def _focal_kernel(o_ref, t_ref, acc_ref, *, block_rows, blocks_per_chunk,
                  rows_total, need_mask):
    c = pl.program_id(0)   # chunk (split across cores on multi-TC chips)
    i = pl.program_id(1)   # row-block within the chunk (reduction axis)

    @pl.when(i == 0)
    def _():
        acc_ref[...] = jnp.zeros_like(acc_ref)

    o = o_ref[...].astype(jnp.float32)
    # `t != 0` on the native dtype (float / int8 / bool all work); the astype is
    # an in-kernel no-op for float targets and a cheap VPU convert otherwise.
    pos = t_ref[...].astype(jnp.float32) != 0.0

    one_m_o = 1.0 - o
    p = jnp.where(pos, o, one_m_o)                          # prob whose log we take
    w = jnp.where(pos, ALPHA * (one_m_o * one_m_o),         # gamma=2 -> two muls
                  (1.0 - ALPHA) * (o * o))
    # TODO(synk): on v7x, check whether the f32 log (EUP) becomes co-binding once
    # HBM is 3.2 TB/s; bf16 log would relax it at reduced accuracy.
    contrib = -w * jnp.log(jnp.maximum(p, 1e-4))            # clamp(min=1e-4)

    if need_mask:
        # Only the last (partial) block pays for the row-validity mask.
        row0 = (c * blocks_per_chunk + i) * block_rows
        interior = row0 + block_rows <= rows_total

        @pl.when(interior)
        def _():
            acc_ref[...] += _row_partial(contrib, block_rows)

        @pl.when(jnp.logical_not(interior))
        def _():
            rid = row0 + jax.lax.broadcasted_iota(jnp.int32, (block_rows, 1), 0)
            acc_ref[...] += _row_partial(
                jnp.where(rid < rows_total, contrib, 0.0), block_rows)
    else:
        acc_ref[...] += _row_partial(contrib, block_rows)


def _plan(rows, max_block_rows, num_chunks):
    """Pick (num_chunks, block_rows, blocks_per_chunk, need_mask); block_rows % 8 == 0."""
    if num_chunks > 1 and rows < 1024:
        num_chunks = 1                    # splitting tiny inputs is pure overhead
    if num_chunks == 1:
        block_rows = min((rows // 8) * 8, max_block_rows)
        blocks_per_chunk = pl.cdiv(rows, block_rows)
    else:
        rows_per_chunk = _round_up(pl.cdiv(rows, num_chunks), 8)
        blocks_per_chunk = pl.cdiv(rows_per_chunk, max_block_rows)
        block_rows = _round_up(pl.cdiv(rows_per_chunk, blocks_per_chunk), 8)
    need_mask = num_chunks * blocks_per_chunk * block_rows != rows
    return num_chunks, block_rows, blocks_per_chunk, need_mask


def _focal_main(o_flat, t_flat, cfg):
    """Kernel path for a 128-aligned flat prefix of >= 1024 elements."""
    max_block_rows, vmem_limit, num_chunks = cfg
    rows = o_flat.shape[0] // LANES
    o2 = o_flat.reshape(rows, LANES)
    t2 = t_flat.reshape(rows, LANES)

    num_chunks, block_rows, blocks_per_chunk, need_mask = _plan(
        rows, max_block_rows, num_chunks)

    if num_chunks == 1:
        in_map = lambda c, i: (i, 0)
    else:
        last_block = pl.cdiv(rows, block_rows) - 1
        # Clamp is a scalar-only safety net; chunk sizing keeps every block's
        # start inside the array for realistic sizes (no wasted overflow DMA).
        in_map = lambda c, i: (jnp.minimum(c * blocks_per_chunk + i, last_block), 0)

    kernel = functools.partial(
        _focal_kernel, block_rows=block_rows, blocks_per_chunk=blocks_per_chunk,
        rows_total=rows, need_mask=need_mask)

    cp = dict(dimension_semantics=("parallel", "arbitrary"))
    if vmem_limit is not None:
        cp["vmem_limit_bytes"] = vmem_limit

    # The (8,128) output block keeps the same index across the reduction axis,
    # so it doubles as the accumulator: no VMEM scratch, no in-kernel epilogue.
    partials = pl.pallas_call(
        kernel,
        out_shape=jax.ShapeDtypeStruct((num_chunks * 8, LANES), jnp.float32),
        grid=(num_chunks, blocks_per_chunk),
        in_specs=[pl.BlockSpec((block_rows, LANES), in_map),
                  pl.BlockSpec((block_rows, LANES), in_map)],
        out_specs=pl.BlockSpec((8, LANES), lambda c, i: (c, 0)),
        compiler_params=pltpu.CompilerParams(**cp),
    )(o2, t2)
    return jnp.sum(partials)   # tiny (num_chunks*8, 128) reduction outside


def _focal_tail(o, t):
    """Plain-jnp path for the small unaligned tail / tiny inputs."""
    o = o.astype(jnp.float32)
    pos = t.astype(jnp.float32) != 0.0
    p = jnp.where(pos, o, 1.0 - o)
    w = jnp.where(pos, ALPHA * (1.0 - o) * (1.0 - o), (1.0 - ALPHA) * o * o)
    return jnp.sum(-w * jnp.log(jnp.maximum(p, 1e-4)))


@jax.jit
def binary_focal_loss_val(out, target):
    # .squeeze() only drops size-1 dims; flattening leaves the values unchanged.
    o = jnp.ravel(out)
    t = jnp.ravel(target)
    n = o.shape[0]

    # Aligned prefix -> kernel; small tail -> plain jnp.  No jnp.pad of the full
    # arrays; when n is lane-aligned the full slice below is elided by XLA.
    n_main = (n // LANES) * LANES
    if n_main < MIN_KERNEL_ELEMS:
        n_main = 0

    loss = jnp.float32(0.0)
    if n_main > 0:
        loss = _focal_main(o[:n_main], t[:n_main], _device_cfg())
    if n_main < n:
        loss = loss + _focal_tail(o[n_main:], t[n_main:])
    return loss


def _reference(out, target):
    o = jnp.ravel(out).astype(jnp.float32)
    t = jnp.ravel(target).astype(jnp.float32)
    pos = t != 0.0
    log_p = jnp.log(jnp.maximum(o, 1e-4))
    log_n = jnp.log(jnp.maximum(1.0 - o, 1e-4))
    positives = jnp.sum(jnp.where(pos, -ALPHA * (1.0 - o) ** GAMMA * log_p, 0.0))
    negatives = jnp.sum(jnp.where(pos, 0.0, -(1.0 - ALPHA) * o ** GAMMA * log_n))
    return positives + negatives


if __name__ == "__main__":
    key = jax.random.PRNGKey(0)
    ks = jax.random.split(key, 6)

    def check(out, target):
        got = jax.block_until_ready(binary_focal_loss_val(out, target))
        want = jax.block_until_ready(_reference(out, target))
        assert jnp.allclose(got, want, rtol=1e-5, atol=1e-4), (got, want)

    # 1) NCHW probabilities + float {0,1} targets, fully aligned (2048 elems).
    out1 = jax.random.uniform(ks[0], (2, 4, 16, 16), dtype=jnp.float32)
    tgt1 = (jax.random.uniform(ks[1], (2, 4, 16, 16)) > 0.7).astype(jnp.float32)
    check(out1, tgt1)

    # 2) Misaligned length (1*1*37*37 = 1369): kernel on the 1280-elem prefix
    #    (partial last row-block -> masked pl.when path) + plain-jnp 89-elem tail.
    out2 = jax.random.uniform(ks[2], (1, 1, 37, 37), dtype=jnp.float32)
    tgt2 = (jax.random.uniform(ks[3], (1, 1, 37, 37)) > 0.5).astype(jnp.float32)
    check(out2, tgt2)

    # 3) int8 targets (no wrapper astype -> 5 instead of 8 HBM bytes/element).
    out3 = jax.random.uniform(ks[4], (2, 4, 32, 64), dtype=jnp.float32)
    tgt3 = (jax.random.uniform(ks[5], (2, 4, 32, 64)) > 0.7).astype(jnp.int8)
    check(out3, tgt3)

    print("KERNEL_OK")
</pallas_src>

<mosaic_0001>
module attributes {stable_mosaic.version = 11 : i64} {
  func.func @_focal_kernel(%arg0: i32, %arg1: i32, %arg2: memref<16x128xf32, #tpu.memory_space<vmem>>, %arg3: memref<16x128xf32, #tpu.memory_space<vmem>>, %arg4: memref<8x128xf32, #tpu.memory_space<vmem>>) attributes {dimension_semantics = [#tpu.dimension_semantics<parallel>, #tpu.dimension_semantics<arbitrary>], iteration_bounds = array<i64: 1, 1>, scalar_prefetch = 0 : i64, scratch_operands = 0 : i64, tpu.core_type = #tpu.core_type<tc>, window_params = [{transform_indices = @transform_0, window_bounds = array<i64: 16, 128>}, {transform_indices = @transform_1, window_bounds = array<i64: 16, 128>}, {transform_indices = @transform_2, window_bounds = array<i64: 8, 128>}]} {
    %c0_i32 = arith.constant 0 : i32
    %0 = arith.cmpi eq, %arg1, %c0_i32 : i32
    %1 = arith.extui %0 : i1 to i32
    %c0_i32_0 = arith.constant 0 : i32
    %2 = arith.cmpi ne, %1, %c0_i32_0 : i32
    scf.if %2 {
      %cst_14 = arith.constant 0.000000e+00 : f32
      %28 = vector.broadcast %cst_14 : f32 to vector<8x128xf32>
      %c0_15 = arith.constant 0 : index
      %c0_16 = arith.constant 0 : index
      %29 = vector.load %arg4[%c0_15, %c0_16] : memref<8x128xf32, #tpu.memory_space<vmem>>, vector<8x128xf32>
      tpu.vector_store %arg4[%c0_15, %c0_16], %28 {strides = array<i32>} : memref<8x128xf32, #tpu.memory_space<vmem>>, vector<8x128xf32>,
    } else {
    }
    %c0 = arith.constant 0 : index
    %c0_1 = arith.constant 0 : index
    %3 = vector.load %arg2[%c0, %c0_1] : memref<16x128xf32, #tpu.memory_space<vmem>>, vector<16x128xf32>
    %c0_2 = arith.constant 0 : index
    %c0_3 = arith.constant 0 : index
    %4 = vector.load %arg3[%c0_2, %c0_3] : memref<16x128xf32, #tpu.memory_space<vmem>>, vector<16x128xf32>
    %cst = arith.constant 0.000000e+00 : f32
    %5 = vector.broadcast %cst : f32 to vector<16x128xf32>
    %6 = arith.cmpf one, %4, %5 : vector<16x128xf32>
    %cst_4 = arith.constant 1.000000e+00 : f32
    %7 = vector.broadcast %cst_4 : f32 to vector<16x128xf32>
    %8 = arith.subf %7, %3 : vector<16x128xf32>
    %9 = arith.select %6, %3, %8 : vector<16x128xi1>, vector<16x128xf32>
    %10 = arith.mulf %8, %8 : vector<16x128xf32>
    %cst_5 = arith.constant 0.00999999977 : f32
    %11 = vector.broadcast %cst_5 : f32 to vector<16x128xf32>
    %12 = arith.mulf %11, %10 : vector<16x128xf32>
    %13 = arith.mulf %3, %3 : vector<16x128xf32>
    %cst_6 = arith.constant 9.900000e-01 : f32
    %14 = vector.broadcast %cst_6 : f32 to vector<16x128xf32>
    %15 = arith.mulf %14, %13 : vector<16x128xf32>
    %16 = arith.select %6, %12, %15 : vector<16x128xi1>, vector<16x128xf32>
    %cst_7 = arith.constant 0.000000e+00 : f32
    %17 = vector.broadcast %cst_7 : f32 to vector<16x128xf32>
    %18 = arith.subf %17, %16 : vector<16x128xf32>
    %cst_8 = arith.constant 9.99999974E-5 : f32
    %19 = vector.broadcast %cst_8 : f32 to vector<16x128xf32>
    %20 = arith.maximumf %9, %19 : vector<16x128xf32>
    %21 = math.log %20 : vector<16x128xf32>
    %22 = arith.mulf %18, %21 : vector<16x128xf32>
    %c0_9 = arith.constant 0 : index
    %c0_10 = arith.constant 0 : index
    %23 = vector.load %arg4[%c0_9, %c0_10] : memref<8x128xf32, #tpu.memory_space<vmem>>, vector<8x128xf32>
    %24 = vector.shape_cast %22 : vector<16x128xf32> to vector<2x8x128xf32>
    %cst_11 = arith.constant dense<0.000000e+00> : vector<8x128xf32>
    %25 = vector.multi_reduction <add>, %24, %cst_11 [0] : vector<2x8x128xf32> to vector<8x128xf32>
    %26 = arith.addf %23, %25 : vector<8x128xf32>
    %c0_12 = arith.constant 0 : index
    %c0_13 = arith.constant 0 : index
    %27 = vector.load %arg4[%c0_12, %c0_13] : memref<8x128xf32, #tpu.memory_space<vmem>>, vector<8x128xf32>
    tpu.vector_store %arg4[%c0_12, %c0_13], %26 {strides = array<i32>} : memref<8x128xf32, #tpu.memory_space<vmem>>, vector<8x128xf32>,
    return
  }
  func.func @transform_0(%arg0: i32, %arg1: i32) -> (i32, i32) {
    %c0_i32 = arith.constant 0 : i32
    %c0_i32_0 = arith.constant 0 : i32
    return %arg1, %c0_i32 : i32, i32
  }
  func.func @transform_1(%arg0: i32, %arg1: i32) -> (i32, i32) {
    %c0_i32 = arith.constant 0 : i32
    %c0_i32_0 = arith.constant 0 : i32
    return %arg1, %c0_i32 : i32, i32
  }
  func.func @transform_2(%arg0: i32, %arg1: i32) -> (i32, i32) {
    %c0_i32 = arith.constant 0 : i32
    %c0_i32_0 = arith.constant 0 : i32
    return %arg0, %c0_i32 : i32, i32
  }
}

</mosaic_0001>

<llo_original>
// kernel: binary_focal_loss_val.1
$region0: #{binary_focal_loss_val.1}
  #allocation0 [shape = 'u32[]', space=smem, size = 0x4, offset = 0x4, fixed_abs, tag = 'smem constant byte address 0x4 - core index']
  #allocation1 [shape = 'u32[72,128]{1,0:T(1,128)}', space=vmem, size = 0x9000, scoped, tag = 'internal scratch']
  %s0 = inlined_call_operand.vmem [shape: f32[16,128], index: 0, kind: input, shape index: {}]
  %s1 = inlined_call_operand.vmem [shape: f32[16,128], index: 1, kind: input, shape index: {}]
  %s2 = inlined_call_operand.vmem [shape: f32[8,128], index: 2, kind: output, shape index: {}]
  %s3 = sld [smem:[#allocation0]]
  $region22: #{binary_focal_loss_val.1} parent=0
    _
  %s5 = ssub.s32 1, %s3
  %s6 = scalar_select 0, %s5, %s3
  // Predicated region
  $region2: #{binary_focal_loss_val.1} parent=0 // pred_check
    _
  $region3: #{binary_focal_loss_val.1} parent=0 // pred_check_branch
    %8 = sbr.rel (0) target = $region5
  $region4: #{binary_focal_loss_val.1} parent=0 // pred_region
    _
  $region5: #{binary_focal_loss_val.1} parent=0 // pred_fallthru
    _
  // Predicated region
  $region6: #{binary_focal_loss_val.1} parent=0 // pred_check
    _
  $region7: #{binary_focal_loss_val.1} parent=0 // pred_check_branch
    %10 = sbr.rel (0) target = $region9
  $region8: #{binary_focal_loss_val.1} parent=0 // pred_region
    _
  $region9: #{binary_focal_loss_val.1} parent=0 // pred_fallthru
    _
  %p11 = scmp.eq.s32.totalorder 0, 0
  // Predicated region
  $region10: #{binary_focal_loss_val.1} parent=0 // pred_check
    %p12 = pneg %p11
  $region11: #{binary_focal_loss_val.1} parent=0 // pred_check_branch
    %14 = sbr.rel (%p12) target = $region13
  $region12: #{binary_focal_loss_val.1} parent=0 // pred_region
    %15 = vst [vmem:[%s2] sm:$0xff] 0.0
  $region13: #{binary_focal_loss_val.1} parent=0 // pred_fallthru
    _
  %v16 = vld [vmem:[%s0] sm:$0xff]
  %v17 = vld [vmem:[%s0 + $0x8] sm:$0xff]
  %v18 = vld [vmem:[%s1] sm:$0xff]
  %v19 = vld [vmem:[%s1 + $0x8] sm:$0xff]
  %vm20 = vcmp.ne.f32.partialorder %v18, 0.0
  %vm21 = vcmp.ne.f32.partialorder %v19, 0.0
  %v22 = vsub.f32 1.0, %v16
  %v23 = vsub.f32 1.0, %v17
  %v24 = vsel %vm20, %v16, %v22
  %v25 = vsel %vm21, %v17, %v23
  %v26 = vmul.f32 %v22, %v22
  %v27 = vmul.f32 %v23, %v23
  %v28 = vmul.f32 %v26, 0.01
  %v29 = vmul.f32 %v27, 0.01
  %v30 = vmul.f32 %v16, %v16
  %v31 = vmul.f32 %v17, %v17
  %v32 = vmul.f32 %v30, 0.99
  %v33 = vmul.f32 %v31, 0.99
  %v34 = vsel %vm20, %v28, %v32
  %v35 = vsel %vm21, %v29, %v33
  %v36 = vsub.f32 0.0, %v34
  %v37 = vsub.f32 0.0, %v35
  %v38 = vmax.f32 %v24, 0.0001
  %v39 = vmax.f32 %v25, 0.0001
  %v40 = vlog2.pop %v38
  %v41 = vmul.f32 %v40, 0.6931472
  %v42 = vlog2.pop %v39
  %v43 = vmul.f32 %v42, 0.6931472
  %v44 = vmul.f32 %v36, %v41
  %v45 = vmul.f32 %v37, %v43
  %v46 = vld [vmem:[%s2] sm:$0xff]
  %v47 = vadd.f32 %v44, %v45
  %v48 = vadd.f32 %v46, %v47
  %49 = vst [vmem:[%s2] sm:$0xff] %v48
  // Predicated region
  $region14: #{binary_focal_loss_val.1} parent=0 // pred_check
    _
  $region15: #{binary_focal_loss_val.1} parent=0 // pred_check_branch
    %51 = sbr.rel (0) target = $region17
  $region16: #{binary_focal_loss_val.1} parent=0 // pred_region
    _
  $region17: #{binary_focal_loss_val.1} parent=0 // pred_fallthru
    _
  // Predicated region
  $region18: #{binary_focal_loss_val.1} parent=0 // pred_check
    _
  $region19: #{binary_focal_loss_val.1} parent=0 // pred_check_branch
    %53 = sbr.rel (0) target = $region21
  $region20: #{binary_focal_loss_val.1} parent=0 // pred_region
    _
  $region21: #{binary_focal_loss_val.1} parent=0 // pred_fallthru
    _

</llo_original>
